<compile_context>
chip_gen: v7x
topology: tpu7x:2x2x1
jax: 0.10.0
libtpu: 0.0.40
codegen_flags: <defaults>
</compile_context>

<pallas_src>
import functools
import math

import jax
import jax.numpy as jnp
import numpy as np
from jax.experimental import pallas as pl
from jax.experimental.pallas import tpu as pltpu


# ---------------------------------------------------------------------------
# Pallas kernel (one batch tile per grid step)
# ---------------------------------------------------------------------------
def seg_attn_kernel(
    q_ref,      # [TB*S, Dm]       query tile, rows already flattened in wrapper
    k_ref,      # [TB, S, P]       key tile
    v_ref,      # [TB, S, P]       value tile
    wt_ref,     # [Dm, P]   f32    projection weight, pre-transposed (broadcast)
    b_ref,      # [1, P]    f32    projection bias (broadcast)
    ws_ref,     # out [TB, P]      weighted sum
    score_ref,  # out [TB, S]      raw attention scores (S on lane axis)
    attn_ref,   # out [TB, S]      softmax attention weights
):
    TB, S, P = k_ref.shape
    inv_sqrt_p = 1.0 / math.sqrt(P)

    # ---- Fused projection: one lane-dense MXU matmul, M = TB*S rows ---------
    proj = jnp.dot(q_ref[...], wt_ref[...],
                   preferred_element_type=jnp.float32) + b_ref[...]   # [TB*S, P]

    # Leading-dim split only (layout-preserving when S % 8 == 0).
    proj3 = proj.reshape(TB, S, P)
    k3 = k_ref[...].astype(jnp.float32)
    v3 = v_ref[...].astype(jnp.float32)

    # ---- Scaled dot-product score: VPU multiply + lane reduce over P --------
    score = jnp.sum(proj3 * k3, axis=-1) * inv_sqrt_p                 # [TB, S]

    # ---- Softmax over the segment (lane) axis; exp on EUP, exact recip ------
    m = jnp.max(score, axis=-1, keepdims=True)
    e = jnp.exp(score - m)
    denom = jnp.sum(e, axis=-1, keepdims=True)
    attn = e * pl.reciprocal(denom, approx=False)                     # [TB, S]

    # ---- Weighted sum over segments on the VPU (no M=1 MXU matmuls) ---------
    ws = jnp.sum(attn[:, :, None] * v3, axis=1)                       # [TB, P]

    ws_ref[...] = ws.astype(ws_ref.dtype)
    score_ref[...] = score.astype(score_ref.dtype)
    attn_ref[...] = attn.astype(attn_ref.dtype)


# ---------------------------------------------------------------------------
# Tile-size heuristic (VMEM-budget, weight-resident and pipeline aware)
# ---------------------------------------------------------------------------
def _pick_block_b(B, S, Dm, P, *, dtype_bytes=4,
                  budget_bytes=24 * 1024 * 1024, min_grid_steps=2):
    """Largest divisor of B whose per-step footprint fits `budget_bytes`,
    capped so the grid has >= min_grid_steps steps, preferring sublane-dense
    (multiple of 8) and MXU-friendly (block_b*S % 256 == 0) tile heights."""
    # Resident across the whole grid: weight + bias double-buffers (f32).
    resident = 2 * 4 * (Dm * P + P)
    avail = max(budget_bytes - resident, 1)
    # Per batch-row footprint: double-buffered streamed tiles + output tiles
    # + in-kernel f32 intermediates (proj, weighted product, score/attn/exp).
    per_row = (
        2 * dtype_bytes * (S * Dm + 2 * S * P)        # q, k, v tiles (x2 buffers)
        + 2 * 4 * (P + 2 * S)                         # ws, score, attn tiles (x2)
        + 4 * (2 * S * P + 4 * S)                     # proj, attn*v, score/exp/attn
    )
    max_tb = max(1, avail // per_row)
    if B >= min_grid_steps:
        max_tb = min(max_tb, max(1, B // min_grid_steps))
    else:
        max_tb = min(max_tb, B)

    best, best_key = 1, None
    for d in range(1, B + 1):
        if B % d or d > max_tb:
            continue
        key = ((d % 8 == 0) or d == B,      # sublane-dense output tiles
               (d * S) % 256 == 0,          # MXU-friendly M dimension
               d)                           # then: as large as possible
        if best_key is None or key > best_key:
            best, best_key = d, key
    return best


# ---------------------------------------------------------------------------
# Wrapper
# ---------------------------------------------------------------------------
def segment_attention_forward(query, key, value, weight, bias, *,
                              block_b=None, vmem_limit_bytes=None,
                              compute_dtype=jnp.float32):
    """
    query:  [B, S, d_model]   key/value: [B, S, d_proj]
    weight: [d_proj, d_model] bias: [d_proj]
    returns (weighted_sum [B,1,d_proj], score [B,S], attn_weight [B,S])
    """
    B, S, Dm = query.shape
    P = weight.shape[0]
    assert weight.shape == (P, Dm)
    assert key.shape == (B, S, P) and value.shape == (B, S, P)

    dtype_bytes = jnp.dtype(compute_dtype).itemsize
    if block_b is None:
        block_b = _pick_block_b(B, S, Dm, P, dtype_bytes=dtype_bytes)
    assert B % block_b == 0, "block_b must divide the batch size"
    grid = (B // block_b,)

    # Layout plumbing done in the wrapper (free / fused under jit):
    #   * flatten query rows so the kernel matmul gets M = block_b*S directly
    #   * pre-transpose the weight so the matmul output is lane-dense in P
    q2 = jnp.asarray(query).astype(compute_dtype).reshape(B * S, Dm)
    k3 = jnp.asarray(key).astype(compute_dtype)
    v3 = jnp.asarray(value).astype(compute_dtype)
    wt = jnp.asarray(weight).T.astype(compute_dtype)            # [Dm, P]
    b2 = jnp.asarray(bias).reshape(1, P).astype(jnp.float32)    # [1, P]

    cp_kwargs = dict(dimension_semantics=("parallel",))
    if vmem_limit_bytes is not None:
        cp_kwargs["vmem_limit_bytes"] = vmem_limit_bytes

    ws, score, attn = pl.pallas_call(
        seg_attn_kernel,
        grid_spec=pltpu.PrefetchScalarGridSpec(
            num_scalar_prefetch=0,
            grid=grid,
            in_specs=[
                pl.BlockSpec((block_b * S, Dm), lambda i: (i, 0)),    # query (flat rows)
                pl.BlockSpec((block_b, S, P), lambda i: (i, 0, 0)),   # key
                pl.BlockSpec((block_b, S, P), lambda i: (i, 0, 0)),   # value
                pl.BlockSpec((Dm, P), lambda i: (0, 0)),              # weight.T (broadcast)
                pl.BlockSpec((1, P), lambda i: (0, 0)),               # bias (broadcast)
            ],
            out_specs=[
                pl.BlockSpec((block_b, P), lambda i: (i, 0)),         # weighted sum
                pl.BlockSpec((block_b, S), lambda i: (i, 0)),         # score
                pl.BlockSpec((block_b, S), lambda i: (i, 0)),         # attn
            ],
        ),
        out_shape=(
            jax.ShapeDtypeStruct((B, P), jnp.float32),
            jax.ShapeDtypeStruct((B, S), jnp.float32),
            jax.ShapeDtypeStruct((B, S), jnp.float32),
        ),
        compiler_params=pltpu.CompilerParams(**cp_kwargs),
    )(q2, k3, v3, wt, b2)

    return ws.reshape(B, 1, P), score, attn


# ---------------------------------------------------------------------------
# Pure-JAX reference (mirror of the PyTorch forward), for self-check
# ---------------------------------------------------------------------------
def segment_attention_reference(query, key, value, weight, bias):
    P = weight.shape[0]
    q = query @ weight.T + bias
    score = jnp.sum(q * key, axis=-1) / math.sqrt(P)
    attn = jax.nn.softmax(score, axis=-1)
    ws = jnp.sum(attn[:, :, None] * value, axis=1, keepdims=True)
    return ws, score, attn


# ---------------------------------------------------------------------------
if __name__ == "__main__":
    # Small shapes consistent with the module; B/S chosen so auto-picked tiles
    # are sublane-dense (block_b = 8) and the grid has 2 pipelined steps.
    B, S, d_model, d_proj = 16, 8, 32, 16

    key0 = jax.random.PRNGKey(0)
    k1, k2, k3, k4, k5 = jax.random.split(key0, 5)
    query = jax.random.normal(k1, (B, S, d_model), jnp.float32)
    key_in = jax.random.normal(k2, (B, S, d_proj), jnp.float32)
    value = jax.random.normal(k3, (B, S, d_proj), jnp.float32)
    weight = 0.1 * jax.random.normal(k4, (d_proj, d_model), jnp.float32)
    bias = 0.1 * jax.random.normal(k5, (d_proj,), jnp.float32)

    # Jit the wrapper so the weight transpose / reshapes are hoisted to compile
    # time and fused around the pallas_call.
    fwd = jax.jit(functools.partial(segment_attention_forward))
    ws, score, attn = jax.block_until_ready(fwd(query, key_in, value, weight, bias))

    ws_r, score_r, attn_r = segment_attention_reference(query, key_in, value, weight, bias)
    assert ws.shape == (B, 1, d_proj) and score.shape == (B, S) and attn.shape == (B, S)
    np.testing.assert_allclose(np.asarray(ws), np.asarray(ws_r), atol=1e-5, rtol=1e-5)
    np.testing.assert_allclose(np.asarray(score), np.asarray(score_r), atol=1e-5, rtol=1e-5)
    np.testing.assert_allclose(np.asarray(attn), np.asarray(attn_r), atol=1e-5, rtol=1e-5)

    print("KERNEL_OK")
</pallas_src>

<mosaic_0001>
module attributes {stable_mosaic.version = 11 : i64} {
  func.func @seg_attn_kernel(%arg0: i32, %arg1: memref<64x32xf32, #tpu.memory_space<vmem>>, %arg2: memref<8x8x16xf32, #tpu.memory_space<vmem>>, %arg3: memref<8x8x16xf32, #tpu.memory_space<vmem>>, %arg4: memref<32x16xf32, #tpu.memory_space<vmem>>, %arg5: memref<1x16xf32, #tpu.memory_space<vmem>>, %arg6: memref<8x16xf32, #tpu.memory_space<vmem>>, %arg7: memref<8x8xf32, #tpu.memory_space<vmem>>, %arg8: memref<8x8xf32, #tpu.memory_space<vmem>>) attributes {dimension_semantics = [#tpu.dimension_semantics<parallel>], iteration_bounds = array<i64: 2>, scalar_prefetch = 0 : i64, scratch_operands = 0 : i64, tpu.core_type = #tpu.core_type<tc>, window_params = [{transform_indices = @transform_0, window_bounds = array<i64: 64, 32>}, {transform_indices = @transform_1, window_bounds = array<i64: 8, 8, 16>}, {transform_indices = @transform_2, window_bounds = array<i64: 8, 8, 16>}, {pipeline_mode = #tpu.pipeline_mode<synchronous>, transform_indices = @transform_3, window_bounds = array<i64: 32, 16>}, {pipeline_mode = #tpu.pipeline_mode<synchronous>, transform_indices = @transform_4, window_bounds = array<i64: 1, 16>}, {transform_indices = @transform_5, window_bounds = array<i64: 8, 16>}, {transform_indices = @transform_6, window_bounds = array<i64: 8, 8>}, {transform_indices = @transform_7, window_bounds = array<i64: 8, 8>}]} {
    %c0 = arith.constant 0 : index
    %c0_0 = arith.constant 0 : index
    %0 = vector.load %arg1[%c0, %c0_0] : memref<64x32xf32, #tpu.memory_space<vmem>>, vector<64x32xf32>
    %c0_1 = arith.constant 0 : index
    %c0_2 = arith.constant 0 : index
    %1 = vector.load %arg4[%c0_1, %c0_2] : memref<32x16xf32, #tpu.memory_space<vmem>>, vector<32x16xf32>
    %cst = arith.constant dense<0.000000e+00> : vector<64x16xf32>
    %2 = tpu.matmul %0, %1, %cst {dimension_numbers = #tpu.dot_dimension_numbers<[1], [0], [0], [1], [0, 0, 1, 1], [], []>} : vector<64x32xf32>, vector<32x16xf32>, vector<64x16xf32> -> vector<64x16xf32>
    %c0_3 = arith.constant 0 : index
    %c0_4 = arith.constant 0 : index
    %3 = vector.load %arg5[%c0_3, %c0_4] : memref<1x16xf32, #tpu.memory_space<vmem>>, vector<1x16xf32>
    %4 = vector.broadcast %3 : vector<1x16xf32> to vector<64x16xf32>
    %5 = arith.addf %2, %4 : vector<64x16xf32>
    %6 = vector.shape_cast %5 : vector<64x16xf32> to vector<8x8x16xf32>
    %c0_5 = arith.constant 0 : index
    %c0_6 = arith.constant 0 : index
    %c0_7 = arith.constant 0 : index
    %7 = vector.load %arg2[%c0_5, %c0_6, %c0_7] : memref<8x8x16xf32, #tpu.memory_space<vmem>>, vector<8x8x16xf32>
    %c0_8 = arith.constant 0 : index
    %c0_9 = arith.constant 0 : index
    %c0_10 = arith.constant 0 : index
    %8 = vector.load %arg3[%c0_8, %c0_9, %c0_10] : memref<8x8x16xf32, #tpu.memory_space<vmem>>, vector<8x8x16xf32>
    %9 = arith.mulf %6, %7 : vector<8x8x16xf32>
    %cst_11 = arith.constant dense<0.000000e+00> : vector<8x8xf32>
    %10 = vector.multi_reduction <add>, %9, %cst_11 [2] : vector<8x8x16xf32> to vector<8x8xf32>
    %cst_12 = arith.constant 2.500000e-01 : f32
    %11 = vector.broadcast %cst_12 : f32 to vector<8x8xf32>
    %12 = arith.mulf %10, %11 : vector<8x8xf32>
    %cst_13 = arith.constant dense<0xFF800000> : vector<8xf32>
    %13 = vector.multi_reduction <maximumf>, %12, %cst_13 [1] : vector<8x8xf32> to vector<8xf32>
    %14 = vector.shape_cast %13 : vector<8xf32> to vector<8x1xf32>
    %15 = vector.broadcast %14 : vector<8x1xf32> to vector<8x8xf32>
    %16 = arith.subf %12, %15 : vector<8x8xf32>
    %17 = math.exp %16 : vector<8x8xf32>
    %cst_14 = arith.constant dense<0.000000e+00> : vector<8xf32>
    %18 = vector.multi_reduction <add>, %17, %cst_14 [1] : vector<8x8xf32> to vector<8xf32>
    %19 = vector.shape_cast %18 : vector<8xf32> to vector<8x1xf32>
    %20 = tpu.reciprocal %19 : vector<8x1xf32> -> vector<8x1xf32>
    %21 = vector.broadcast %20 : vector<8x1xf32> to vector<8x8xf32>
    %22 = arith.mulf %17, %21 : vector<8x8xf32>
    %23 = vector.shape_cast %22 : vector<8x8xf32> to vector<8x8x1xf32>
    %24 = vector.broadcast %23 : vector<8x8x1xf32> to vector<8x8x16xf32>
    %25 = arith.mulf %24, %8 : vector<8x8x16xf32>
    %cst_15 = arith.constant dense<0.000000e+00> : vector<8x16xf32>
    %26 = vector.multi_reduction <add>, %25, %cst_15 [1] : vector<8x8x16xf32> to vector<8x16xf32>
    %c0_16 = arith.constant 0 : index
    %c0_17 = arith.constant 0 : index
    %27 = vector.load %arg6[%c0_16, %c0_17] : memref<8x16xf32, #tpu.memory_space<vmem>>, vector<8x16xf32>
    tpu.vector_store %arg6[%c0_16, %c0_17], %26 {strides = array<i32>} : memref<8x16xf32, #tpu.memory_space<vmem>>, vector<8x16xf32>,
    %c0_18 = arith.constant 0 : index
    %c0_19 = arith.constant 0 : index
    %28 = vector.load %arg7[%c0_18, %c0_19] : memref<8x8xf32, #tpu.memory_space<vmem>>, vector<8x8xf32>
    tpu.vector_store %arg7[%c0_18, %c0_19], %12 {strides = array<i32>} : memref<8x8xf32, #tpu.memory_space<vmem>>, vector<8x8xf32>,
    %c0_20 = arith.constant 0 : index
    %c0_21 = arith.constant 0 : index
    %29 = vector.load %arg8[%c0_20, %c0_21] : memref<8x8xf32, #tpu.memory_space<vmem>>, vector<8x8xf32>
    tpu.vector_store %arg8[%c0_20, %c0_21], %22 {strides = array<i32>} : memref<8x8xf32, #tpu.memory_space<vmem>>, vector<8x8xf32>,
    return
  }
  func.func @transform_0(%arg0: i32) -> (i32, i32) {
    %c0_i32 = arith.constant 0 : i32
    %c0_i32_0 = arith.constant 0 : i32
    return %arg0, %c0_i32 : i32, i32
  }
  func.func @transform_1(%arg0: i32) -> (i32, i32, i32) {
    %c0_i32 = arith.constant 0 : i32
    %c0_i32_0 = arith.constant 0 : i32
    %c0_i32_1 = arith.constant 0 : i32
    return %arg0, %c0_i32, %c0_i32_0 : i32, i32, i32
  }
  func.func @transform_2(%arg0: i32) -> (i32, i32, i32) {
    %c0_i32 = arith.constant 0 : i32
    %c0_i32_0 = arith.constant 0 : i32
    %c0_i32_1 = arith.constant 0 : i32
    return %arg0, %c0_i32, %c0_i32_0 : i32, i32, i32
  }
  func.func @transform_3(%arg0: i32) -> (i32, i32) {
    %c0_i32 = arith.constant 0 : i32
    %c0_i32_0 = arith.constant 0 : i32
    %c0_i32_1 = arith.constant 0 : i32
    return %c0_i32, %c0_i32_0 : i32, i32
  }
  func.func @transform_4(%arg0: i32) -> (i32, i32) {
    %c0_i32 = arith.constant 0 : i32
    %c0_i32_0 = arith.constant 0 : i32
    %c0_i32_1 = arith.constant 0 : i32
    return %c0_i32, %c0_i32_0 : i32, i32
  }
  func.func @transform_5(%arg0: i32) -> (i32, i32) {
    %c0_i32 = arith.constant 0 : i32
    %c0_i32_0 = arith.constant 0 : i32
    return %arg0, %c0_i32 : i32, i32
  }
  func.func @transform_6(%arg0: i32) -> (i32, i32) {
    %c0_i32 = arith.constant 0 : i32
    %c0_i32_0 = arith.constant 0 : i32
    return %arg0, %c0_i32 : i32, i32
  }
  func.func @transform_7(%arg0: i32) -> (i32, i32) {
    %c0_i32 = arith.constant 0 : i32
    %c0_i32_0 = arith.constant 0 : i32
    return %arg0, %c0_i32 : i32, i32
  }
}

</mosaic_0001>

<llo_original>
// kernel: segment_attention_forward.1
$region0: #{segment_attention_forward.1}
  #allocation0 [shape = 'u32[]', space=smem, size = 0x4, offset = 0x4, fixed_abs, tag = 'smem constant byte address 0x4 - core index']
  #allocation1 [shape = 'u32[144,128]{1,0:T(1,128)}', space=vmem, size = 0x12000, scoped, tag = 'internal scratch']
  %s0 = inlined_call_operand.hbm [shape: f32[128,32], index: 0, kind: input, shape index: {}]
  %s1 = inlined_call_operand.hbm [shape: f32[16,8,16], index: 1, kind: input, shape index: {}]
  %s2 = inlined_call_operand.hbm [shape: f32[16,8,16], index: 2, kind: input, shape index: {}]
  %s3 = inlined_call_operand.vmem [shape: f32[32,16], index: 3, kind: input, shape index: {}]
  %s4 = inlined_call_operand.vmem [shape: f32[1,16], index: 4, kind: input, shape index: {}]
  %s5 = inlined_call_operand.hbm [shape: f32[16,16], index: 5, kind: output, shape index: {0}]
  %s6 = inlined_call_operand.vmem [shape: f32[16,8], index: 6, kind: output, shape index: {1}]
  %s7 = inlined_call_operand.vmem [shape: f32[16,8], index: 7, kind: output, shape index: {2}]
  %8 = xla_tuple %s5, %s6, %s7
  %s9 = sld [smem:[#allocation0]]
  $region81: #{segment_attention_forward.1} parent=0
    _
  %s11 = ssub.s32 1, %s9
  %s12 = scalar_select 0, %s11, %s9
  $region1: #{segment_attention_forward.1} parent=0
    #allocation2 [shape = 'u8[65536]{0}', space=vmem, size = 0x10000, scoped, tag = 'input window, operand 0']
    #allocation3 [shape = 's32[2]{0}', space=sflag, size = 0x8, scoped, tag = 'scoped memory for segment_attention_forward.1']
    #allocation4 [shape = 's32[2]{0}', space=sflag, size = 0x8, scoped, tag = 'scoped memory for segment_attention_forward.1']
    #allocation5 [shape = 'u8[65536]{0}', space=vmem, size = 0x10000, scoped, tag = 'input window, operand 1']
    #allocation6 [shape = 's32[2]{0}', space=sflag, size = 0x8, scoped, tag = 'scoped memory for segment_attention_forward.1']
    #allocation7 [shape = 'u8[65536]{0}', space=vmem, size = 0x10000, scoped, tag = 'input window, operand 2']
    #allocation8 [shape = 'u8[8192]{0}', space=vmem, size = 0x2000, scoped, tag = 'output window, operand 0']
    %13 = vsyncpa [#allocation3], 0
    %s14 = scalar_lea.sflag [#allocation3], 1
    %15 = vsyncpa %s14, 0
    %16 = vsyncpa [#allocation6], 0
    %s17 = scalar_lea.sflag [#allocation6], 1
    %18 = vsyncpa %s17, 0
    %19 = vsyncpa [#allocation4], 0
    %s20 = scalar_lea.sflag [#allocation4], 1
    %21 = vsyncpa %s20, 0
    loop: start=0, step=1, limit=4
    $region2: #{segment_attention_forward.1} parent=1 // loop_pre_header
      _
    $region3: #{segment_attention_forward.1} parent=1 // loop_header
      %s23 = sphi 0, %s27
      %p24 = scmp.ge.s32.totalorder %s23, 4
      %s33 = sphi 0, %s35
      %s36 = sphi 0, %s33
      %s37 = sphi 0, %s36
      %s53 = sphi 0, %s37
      %s59 = sphi 0, %s61
      %s62 = sphi 0, %s59
      %s63 = sphi 0, %s62
      %s79 = sphi 0, %s63
      %s85 = sphi 0, %s87
      %s88 = sphi 0, %s85
      %s89 = sphi 0, %s88
      %s105 = sphi 0, %s89
      %s109 = sphi 0, %s109
      %s111 = sphi 0, %s109
      %s112 = sphi 0, %s111
      %s126 = sphi 0, %s112
      %s130 = sphi 0, %s130
      %s132 = sphi 0, %s130
      %s133 = sphi 0, %s132
      %s147 = sphi 0, %s133
      %s153 = sphi 0, %s155
      %s156 = sphi 0, %s153
      %s157 = sphi 0, %s156
      %s173 = sphi 0, %s157
      %s179 = sphi 0, %s181
      %s182 = sphi 0, %s179
      %s183 = sphi 0, %s182
      %s199 = sphi 0, %s183
      %s205 = sphi 0, %s207
      %s208 = sphi 0, %s205
      %s209 = sphi 0, %s208
      %s225 = sphi 0, %s209
    $region4: #{segment_attention_forward.1} parent=1 // loop_header_branch
      %26 = sbr.rel (%p24) target = $region8
    $region5: #{segment_attention_forward.1} parent=1 // loop_body
      %s28 = ssub.s32 %s23, 1
      %s29 = ssub.s32 %s23, 2
      %s30 = sadd.s32 %s23, 1
      %s31 = ssub.s32 %s23, %s30
      %p32 = scmp.eq.s32.totalorder %s31, 0
      %s34 = sadd.s32 %s33, 1
      %s35 = scalar_select %p32, %s33, %s34
      %p38 = pneg %p32
      %p39 = scmp.eq.s32.totalorder %s23, 1
      %p40 = por %p38, %p39
      %p41 = scmp.ne.s32.totalorder %s33, %s36
      %p42 = scmp.eq.s32.totalorder %s23, 0
      %p43 = por %p41, %p42
      %p44 = scmp.ne.s32.totalorder %s33, %s36
      %p45 = scmp.eq.s32.totalorder %s28, 1
      %p46 = por %p44, %p45
      %p47 = scmp.ne.s32.totalorder %s36, %s37
      %p48 = scmp.eq.s32.totalorder %s28, 0
      %p49 = por %p47, %p48
      %p50 = scmp.ne.s32.totalorder %s36, %s37
      %p51 = scmp.eq.s32.totalorder %s29, 1
      %p52 = por %p50, %p51
      %p54 = scmp.ne.s32.totalorder %s37, %s53
      %p55 = scmp.eq.s32.totalorder %s29, 0
      %p56 = por %p54, %p55
      %s57 = ssub.s32 %s23, %s30
      %p58 = scmp.eq.s32.totalorder %s57, 0
      %s60 = sadd.s32 %s59, 1
      %s61 = scalar_select %p58, %s59, %s60
      %p64 = pneg %p58
      %p65 = scmp.eq.s32.totalorder %s23, 1
      %p66 = por %p64, %p65
      %p67 = scmp.ne.s32.totalorder %s59, %s62
      %p68 = scmp.eq.s32.totalorder %s23, 0
      %p69 = por %p67, %p68
      %p70 = scmp.ne.s32.totalorder %s59, %s62
      %p71 = scmp.eq.s32.totalorder %s28, 1
      %p72 = por %p70, %p71
      %p73 = scmp.ne.s32.totalorder %s62, %s63
      %p74 = scmp.eq.s32.totalorder %s28, 0
      %p75 = por %p73, %p74
      %p76 = scmp.ne.s32.totalorder %s62, %s63
      %p77 = scmp.eq.s32.totalorder %s29, 1
      %p78 = por %p76, %p77
      %p80 = scmp.ne.s32.totalorder %s63, %s79
      %p81 = scmp.eq.s32.totalorder %s29, 0
      %p82 = por %p80, %p81
      %s83 = ssub.s32 %s23, %s30
      %p84 = scmp.eq.s32.totalorder %s83, 0
      %s86 = sadd.s32 %s85, 1
      %s87 = scalar_select %p84, %s85, %s86
      %p90 = pneg %p84
      %p91 = scmp.eq.s32.totalorder %s23, 1
      %p92 = por %p90, %p91
      %p93 = scmp.ne.s32.totalorder %s85, %s88
      %p94 = scmp.eq.s32.totalorder %s23, 0
      %p95 = por %p93, %p94
      %p96 = scmp.ne.s32.totalorder %s85, %s88
      %p97 = scmp.eq.s32.totalorder %s28, 1
      %p98 = por %p96, %p97
      %p99 = scmp.ne.s32.totalorder %s88, %s89
      %p100 = scmp.eq.s32.totalorder %s28, 0
      %p101 = por %p99, %p100
      %p102 = scmp.ne.s32.totalorder %s88, %s89
      %p103 = scmp.eq.s32.totalorder %s29, 1
      %p104 = por %p102, %p103
      %p106 = scmp.ne.s32.totalorder %s89, %s105
      %p107 = scmp.eq.s32.totalorder %s29, 0
      %p108 = por %p106, %p107
      %s110 = sadd.s32 %s109, 1
      %p113 = scmp.eq.s32.totalorder %s23, 1
      %p114 = scmp.ne.s32.totalorder %s109, %s111
      %p115 = scmp.eq.s32.totalorder %s23, 0
      %p116 = por %p114, %p115
      %p117 = scmp.ne.s32.totalorder %s109, %s111
      %p118 = scmp.eq.s32.totalorder %s28, 1
      %p119 = por %p117, %p118
      %p120 = scmp.ne.s32.totalorder %s111, %s112
      %p121 = scmp.eq.s32.totalorder %s28, 0
      %p122 = por %p120, %p121
      %p123 = scmp.ne.s32.totalorder %s111, %s112
      %p124 = scmp.eq.s32.totalorder %s29, 1
      %p125 = por %p123, %p124
      %p127 = scmp.ne.s32.totalorder %s112, %s126
      %p128 = scmp.eq.s32.totalorder %s29, 0
      %p129 = por %p127, %p128
      %s131 = sadd.s32 %s130, 1
      %p134 = scmp.eq.s32.totalorder %s23, 1
      %p135 = scmp.ne.s32.totalorder %s130, %s132
      %p136 = scmp.eq.s32.totalorder %s23, 0
      %p137 = por %p135, %p136
      %p138 = scmp.ne.s32.totalorder %s130, %s132
      %p139 = scmp.eq.s32.totalorder %s28, 1
      %p140 = por %p138, %p139
      %p141 = scmp.ne.s32.totalorder %s132, %s133
      %p142 = scmp.eq.s32.totalorder %s28, 0
      %p143 = por %p141, %p142
      %p144 = scmp.ne.s32.totalorder %s132, %s133
      %p145 = scmp.eq.s32.totalorder %s29, 1
      %p146 = por %p144, %p145
      %p148 = scmp.ne.s32.totalorder %s133, %s147
      %p149 = scmp.eq.s32.totalorder %s29, 0
      %p150 = por %p148, %p149
      %s151 = ssub.s32 %s23, %s30
      %p152 = scmp.eq.s32.totalorder %s151, 0
      %s154 = sadd.s32 %s153, 1
      %s155 = scalar_select %p152, %s153, %s154
      %p158 = pneg %p152
      %p159 = scmp.eq.s32.totalorder %s23, 1
      %p160 = por %p158, %p159
      %p161 = scmp.ne.s32.totalorder %s153, %s156
      %p162 = scmp.eq.s32.totalorder %s23, 0
      %p163 = por %p161, %p162
      %p164 = scmp.ne.s32.totalorder %s153, %s156
      %p165 = scmp.eq.s32.totalorder %s28, 1
      %p166 = por %p164, %p165
      %p167 = scmp.ne.s32.totalorder %s156, %s157
      %p168 = scmp.eq.s32.totalorder %s28, 0
      %p169 = por %p167, %p168
      %p170 = scmp.ne.s32.totalorder %s156, %s157
      %p171 = scmp.eq.s32.totalorder %s29, 1
      %p172 = por %p170, %p171
      %p174 = scmp.ne.s32.totalorder %s157, %s173
      %p175 = scmp.eq.s32.totalorder %s29, 0
      %p176 = por %p174, %p175
      %s177 = ssub.s32 %s23, %s30
      %p178 = scmp.eq.s32.totalorder %s177, 0
      %s180 = sadd.s32 %s179, 1
      %s181 = scalar_select %p178, %s179, %s180
      %p184 = pneg %p178
      %p185 = scmp.eq.s32.totalorder %s23, 1
      %p186 = por %p184, %p185
      %p187 = scmp.ne.s32.totalorder %s179, %s182
      %p188 = scmp.eq.s32.totalorder %s23, 0
      %p189 = por %p187, %p188
      %p190 = scmp.ne.s32.totalorder %s179, %s182
      %p191 = scmp.eq.s32.totalorder %s28, 1
      %p192 = por %p190, %p191
      %p193 = scmp.ne.s32.totalorder %s182, %s183
      %p194 = scmp.eq.s32.totalorder %s28, 0
      %p195 = por %p193, %p194
      %p196 = scmp.ne.s32.totalorder %s182, %s183
      %p197 = scmp.eq.s32.totalorder %s29, 1
      %p198 = por %p196, %p197
      %p200 = scmp.ne.s32.totalorder %s183, %s199
      %p201 = scmp.eq.s32.totalorder %s29, 0
      %p202 = por %p200, %p201
      %s203 = ssub.s32 %s23, %s30
      %p204 = scmp.eq.s32.totalorder %s203, 0
      %s206 = sadd.s32 %s205, 1
      %s207 = scalar_select %p204, %s205, %s206
      %p210 = pneg %p204
      %p211 = scmp.eq.s32.totalorder %s23, 1
      %p212 = por %p210, %p211
      %p213 = scmp.ne.s32.totalorder %s205, %s208
      %p214 = scmp.eq.s32.totalorder %s23, 0
      %p215 = por %p213, %p214
      %p216 = scmp.ne.s32.totalorder %s205, %s208
      %p217 = scmp.eq.s32.totalorder %s28, 1
      %p218 = por %p216, %p217
      %p219 = scmp.ne.s32.totalorder %s208, %s209
      %p220 = scmp.eq.s32.totalorder %s28, 0
      %p221 = por %p219, %p220
      %p222 = scmp.ne.s32.totalorder %s208, %s209
      %p223 = scmp.eq.s32.totalorder %s29, 1
      %p224 = por %p222, %p223
      %p226 = scmp.ne.s32.totalorder %s209, %s225
      %p227 = scmp.eq.s32.totalorder %s29, 0
      %p228 = por %p226, %p227
      %p229 = scmp.le.s32.totalorder 1, %s23
      %p230 = scmp.lt.s32.totalorder %s23, 3
      %p231 = pnand %p229, %p230
      %p232 = pneg %p231
      // Predicated region
      $region9: #{segment_attention_forward.1} parent=5 // pred_check
        _
      $region10: #{segment_attention_forward.1} parent=5 // pred_check_branch
        %234 = sbr.rel (%p231) target = $region12
      $region11: #{segment_attention_forward.1} parent=5 // pred_region
        %s235 = ssub.s32 %s23, 1
        // Predicated region
        $region13: #{segment_attention_forward.1} parent=11 // pred_check
          %p236 = pneg %p122
        $region14: #{segment_attention_forward.1} parent=11 // pred_check_branch
          %238 = sbr.rel (%p236) target = $region16
        $region15: #{segment_attention_forward.1} parent=11 // pred_region
          _
        $region16: #{segment_attention_forward.1} parent=11 // pred_fallthru
          _
        // Predicated region
        $region17: #{segment_attention_forward.1} parent=11 // pred_check
          %p239 = pneg %p143
        $region18: #{segment_attention_forward.1} parent=11 // pred_check_branch
          %241 = sbr.rel (%p239) target = $region20
        $region19: #{segment_attention_forward.1} parent=11 // pred_region
          _
        $region20: #{segment_attention_forward.1} parent=11 // pred_fallthru
          _
      $region12: #{segment_attention_forward.1} parent=5 // pred_fallthru
        _
      %p242 = scmp.lt.s32.totalorder %s23, 2
      // Predicated region
      $region21: #{segment_attention_forward.1} parent=5 // pred_check
        %p243 = pneg %p242
      $region22: #{segment_attention_forward.1} parent=5 // pred_check_branch
        %245 = sbr.rel (%p243) target = $region24
      $region23: #{segment_attention_forward.1} parent=5 // pred_region
        // Predicated region
        $region25: #{segment_attention_forward.1} parent=23 // pred_check
          %p246 = pneg %p43
        $region26: #{segment_attention_forward.1} parent=23 // pred_check_branch
          %248 = sbr.rel (%p246) target = $region28
        $region27: #{segment_attention_forward.1} parent=23 // pred_region
          %s249 = sand.u32 %s33, 1
          %s250 = scalar_lea.sflag [#allocation3], %s249
          %s251 = sand.u32 %s33, 1
          %s252 = smul.addr %s251, 64
          %s253 = scalar_lea.vmem [#allocation2], %s252
          %s254 = smul.u32 8, %s23
          %s256 = ssub.s32 1024, 1024
          %257 = vsyncadd %s250, %s256
          %s258 = smul.addr %s254, 128
          %s259 = scalar_lea.hbm %s0, %s258
          %s260 = sshll.u32 %s253, 4
          %s261 = int_to_ptr.vmem [resolvable:$true] %s260
          %266 = dma.hbm_to_vmem [thread:$0]  %s259, 1024, %s261, %s250, 128, 128, 8
        $region28: #{segment_attention_forward.1} parent=23 // pred_fallthru
          _
        // Predicated region
        $region29: #{segment_attention_forward.1} parent=23 // pred_check
          %p267 = pneg %p69
        $region30: #{segment_attention_forward.1} parent=23 // pred_check_branch
          %269 = sbr.rel (%p267) target = $region32
        $region31: #{segment_attention_forward.1} parent=23 // pred_region
          %s270 = sand.u32 %s23, 1
          %s271 = scalar_lea.sflag [#allocation6], %s270
          %s272 = sand.u32 %s59, 1
          %s273 = smul.addr %s272, 64
          %s274 = scalar_lea.vmem [#allocation5], %s273
          %s275 = smul.u32 8, %s23
          %s277 = ssub.s32 1024, 1024
          %278 = vsyncadd %s271, %s277
          %s279 = smul.addr %s275, 128
          %s280 = scalar_lea.hbm %s1, %s279
          %s281 = sshll.u32 %s274, 4
          %s282 = int_to_ptr.vmem [resolvable:$true] %s281
          %287 = dma.hbm_to_vmem [thread:$0]  %s280, 1024, %s282, %s271, 128, 128, 8
        $region32: #{segment_attention_forward.1} parent=23 // pred_fallthru
          _
        // Predicated region
        $region33: #{segment_attention_forward.1} parent=23 // pred_check
          %p288 = pneg %p95
        $region34: #{segment_attention_forward.1} parent=23 // pred_check_branch
          %290 = sbr.rel (%p288) target = $region36
        $region35: #{segment_attention_forward.1} parent=23 // pred_region
          %s291 = sand.u32 %s23, 1
          %s292 = scalar_lea.sflag [#allocation6], %s291
          %s293 = sand.u32 %s85, 1
          %s294 = smul.addr %s293, 64
          %s295 = scalar_lea.vmem [#allocation7], %s294
          %s296 = smul.u32 8, %s23
          %s298 = ssub.s32 1024, 1024
          %299 = vsyncadd %s292, %s298
          %s300 = smul.addr %s296, 128
          %s301 = scalar_lea.hbm %s2, %s300
          %s302 = sshll.u32 %s295, 4
          %s303 = int_to_ptr.vmem [resolvable:$true] %s302
          %308 = dma.hbm_to_vmem [thread:$0]  %s301, 1024, %s303, %s292, 128, 128, 8
        $region36: #{segment_attention_forward.1} parent=23 // pred_fallthru
          _
      $region24: #{segment_attention_forward.1} parent=5 // pred_fallthru
        _
      %p309 = scmp.le.s32.totalorder 1, %s23
      %p310 = scmp.lt.s32.totalorder %s23, 3
      %p311 = pnand %p309, %p310
      %p312 = pneg %p311
      // Predicated region
      $region37: #{segment_attention_forward.1} parent=5 // pred_check
        _
      $region38: #{segment_attention_forward.1} parent=5 // pred_check_branch
        %314 = sbr.rel (%p311) target = $region40
      $region39: #{segment_attention_forward.1} parent=5 // pred_region
        %s315 = ssub.s32 %s23, 1
        %s316 = sand.u32 %s36, 1
        %s317 = scalar_lea.sflag [#allocation3], %s316
        %s318 = sand.u32 %s36, 1
        %s319 = smul.addr %s318, 64
        %s320 = scalar_lea.vmem [#allocation2], %s319
        // Predicated region
        $region41: #{segment_attention_forward.1} parent=39 // pred_check
          %p321 = pneg %p49
        $region42: #{segment_attention_forward.1} parent=39 // pred_check_branch
          %323 = sbr.rel (%p321) target = $region44
        $region43: #{segment_attention_forward.1} parent=39 // pred_region
          %324 = dma.done %s317, 1024
        $region44: #{segment_attention_forward.1} parent=39 // pred_fallthru
          _
        %s325 = sand.u32 %s28, 1
        %s326 = scalar_lea.sflag [#allocation6], %s325
        %s327 = sand.u32 %s62, 1
        %s328 = smul.addr %s327, 64
        %s329 = scalar_lea.vmem [#allocation5], %s328
        // Predicated region
        $region45: #{segment_attention_forward.1} parent=39 // pred_check
          %p330 = pneg %p75
        $region46: #{segment_attention_forward.1} parent=39 // pred_check_branch
          %332 = sbr.rel (%p330) target = $region48
        $region47: #{segment_attention_forward.1} parent=39 // pred_region
          %333 = dma.done %s326, 1024
        $region48: #{segment_attention_forward.1} parent=39 // pred_fallthru
          _
        %s334 = sand.u32 %s28, 1
        %s335 = scalar_lea.sflag [#allocation6], %s334
        %s336 = sand.u32 %s88, 1
        %s337 = smul.addr %s336, 64
        %s338 = scalar_lea.vmem [#allocation7], %s337
        // Predicated region
        $region49: #{segment_attention_forward.1} parent=39 // pred_check
          %p339 = pneg %p101
        $region50: #{segment_attention_forward.1} parent=39 // pred_check_branch
          %341 = sbr.rel (%p339) target = $region52
        $region51: #{segment_attention_forward.1} parent=39 // pred_region
          %342 = dma.done %s335, 1024
        $region52: #{segment_attention_forward.1} parent=39 // pred_fallthru
          _
        %s343 = sand.u32 %s36, 1
        %s344 = scalar_lea.sflag [#allocation3], %s343
        %s345 = sand.u32 %s36, 1
        %s346 = smul.addr %s345, 64
        %s347 = scalar_lea.vmem [#allocation2], %s346
        %p348 = pneg %p49
        %p349 = pneg %p46
        %s350 = sand.u32 %s28, 1
        %s351 = scalar_lea.sflag [#allocation6], %s350
        %s352 = sand.u32 %s62, 1
        %s353 = smul.addr %s352, 64
        %s354 = scalar_lea.vmem [#allocation5], %s353
        %p355 = pneg %p75
        %p356 = pneg %p72
        %s357 = sand.u32 %s28, 1
        %s358 = scalar_lea.sflag [#allocation6], %s357
        %s359 = sand.u32 %s88, 1
        %s360 = smul.addr %s359, 64
        %s361 = scalar_lea.vmem [#allocation7], %s360
        %p362 = pneg %p101
        %p363 = pneg %p98
        %p364 = pneg %p122
        %p365 = pneg %p119
        %p366 = pneg %p143
        %p367 = pneg %p140
        %p368 = pneg %p169
        %p369 = pneg %p166
        %s370 = sand.u32 %s156, 1
        %s371 = scalar_lea.sflag [#allocation4], %s370
        %s372 = sand.u32 %s156, 1
        %s373 = smul.addr %s372, 8
        %s374 = scalar_lea.vmem [#allocation8], %s373
        %p375 = pneg %p195
        %p376 = pneg %p192
        %p377 = scmp.lt.s32.totalorder %s28, 1
        %s378 = scalar_select %p377, %s28, 1
        %s379 = smul.addr %s378, 8
        %s380 = scalar_lea.vmem %s6, %s379
        %p381 = pneg %p221
        %p382 = pneg %p218
        %p383 = scmp.lt.s32.totalorder %s28, 1
        %s384 = scalar_select %p383, %s28, 1
        %s385 = smul.addr %s384, 8
        %s386 = scalar_lea.vmem %s7, %s385
        %s387 = smul.u32 8, %s28
        %s388 = smul.u32 8, %s28
        %s389 = smul.u32 8, %s28
        %p390 = scmp.lt.s32.totalorder %s28, 1
        %s391 = scalar_select %p390, %s28, 1
        %s392 = smul.addr %s391, 8
        %s393 = scalar_lea.vmem %s6, %s392
        %p394 = scmp.lt.s32.totalorder %s28, 1
        %s395 = scalar_select %p394, %s28, 1
        %s396 = smul.addr %s395, 8
        %s397 = scalar_lea.vmem %s7, %s396
        %v398 = vld [vmem:[%s320] sm:$0xff]
        %v399 = vld [vmem:[%s320 + $0x8] sm:$0xff]
        %v400 = vld [vmem:[%s320 + $0x10] sm:$0xff]
        %v401 = vld [vmem:[%s320 + $0x18] sm:$0xff]
        %v402 = vld [vmem:[%s320 + $0x20] sm:$0xff]
        %v403 = vld [vmem:[%s320 + $0x28] sm:$0xff]
        %v404 = vld [vmem:[%s320 + $0x30] sm:$0xff]
        %v405 = vld [vmem:[%s320 + $0x38] sm:$0xff]
        %v406 = vld [vmem:[%s3] sm:$0xff]
        %v407 = vld [vmem:[%s3 + $0x8] sm:$0xff]
        %v408 = vld [vmem:[%s3 + $0x10] sm:$0xff]
        %v409 = vld [vmem:[%s3 + $0x18] sm:$0xff]
        %v410 = vld [vmem:[%s4] sm:$0x1]
        %v412 = vlaneseq
        %v413 = vshrl.u32 %v412, 7
        %v414 = vsub.s32 0, %v413
        %v415 = vrot.slane %v410, %v414
        %vm417 = vcmask 261120
        %v419 = vsel %vm417, %v398, 0
        %v422 = vsel %vm417, %v399, 0
        %v425 = vsel %vm417, %v400, 0
        %v428 = vsel %vm417, %v401, 0
        %v431 = vsel %vm417, %v402, 0
        %v434 = vsel %vm417, %v403, 0
        %v437 = vsel %vm417, %v404, 0
        %v440 = vsel %vm417, %v405, 0
        %442 = vmatprep.subr.mxu0 0.0
        %443 = vmatpush1.msra.mxu0 %v406
        %444 = vmatprep.subr.mxu0 0.0
        %445 = vmatpush1.msra.mxu0 %v407
        %446 = vmatprep.subr.mxu0 0.0
        %447 = vmatpush1.msra.mxu0 %v408
        %448 = vmatprep.subr.mxu0 0.0
        %449 = vmatpush1.msra.mxu0 %v409
        %450 = vmatprep.subr.mxu0 0.0
        %451 = vmatpush1.msra.mxu0 0.0
        %452 = vmatprep.subr.mxu0 0.0
        %453 = vmatpush1.msra.mxu0 0.0
        %454 = vmatprep.subr.mxu0 0.0
        %455 = vmatpush1.msra.mxu0 0.0
        %456 = vmatprep.subr.mxu0 0.0
        %457 = vmatpush1.msra.mxu0 0.0
        %458 = vmatprep.subr.mxu0 0.0
        %459 = vmatpush1.msra.mxu0 0.0
        %460 = vmatprep.subr.mxu0 0.0
        %461 = vmatpush1.msra.mxu0 0.0
        %462 = vmatprep.subr.mxu0 0.0
        %463 = vmatpush1.msra.mxu0 0.0
        %464 = vmatprep.subr.mxu0 0.0
        %465 = vmatpush1.msra.mxu0 0.0
        %466 = vmatprep.subr.mxu0 0.0
        %467 = vmatpush1.msra.mxu0 0.0
        %468 = vmatprep.subr.mxu0 0.0
        %469 = vmatpush1.msra.mxu0 0.0
        %470 = vmatprep.subr.mxu0 0.0
        %471 = vmatpush1.msra.mxu0 0.0
        %472 = vmatprep.subr.mxu0 0.0
        %473 = vmatpush1.msra.mxu0 0.0
        %474 = vmatprep.subr.mxu0 0.0
        %475 = vmatpush1.msra.mxu0 0.0
        %476 = vmatprep.subr.mxu0 0.0
        %477 = vmatpush1.msra.mxu0 0.0
        %478 = vmatprep.subr.mxu0 0.0
        %479 = vmatpush1.msra.mxu0 0.0
        %480 = vmatprep.subr.mxu0 0.0
        %481 = vmatpush1.msra.mxu0 0.0
        %482 = vmatprep.subr.mxu0 0.0
        %483 = vmatpush1.msra.mxu0 0.0
        %484 = vmatprep.subr.mxu0 0.0
        %485 = vmatpush1.msra.mxu0 0.0
        %486 = vmatprep.subr.mxu0 0.0
        %487 = vmatpush1.msra.mxu0 0.0
        %488 = vmatprep.subr.mxu0 0.0
        %489 = vmatpush1.msra.mxu0 0.0
        %490 = vmatprep.subr.mxu0 0.0
        %491 = vmatpush1.msra.mxu0 0.0
        %492 = vmatprep.subr.mxu0 0.0
        %493 = vmatpush1.msra.mxu0 0.0
        %494 = vmatprep.subr.mxu0 0.0
        %495 = vmatpush1.msra.mxu0 0.0
        %496 = vmatprep.subr.mxu0 0.0
        %497 = vmatpush1.msra.mxu0 0.0
        %498 = vmatprep.subr.mxu0 0.0
        %499 = vmatpush1.msra.mxu0 0.0
        %500 = vmatprep.subr.mxu0 0.0
        %501 = vmatpush1.msra.mxu0 0.0
        %502 = vmatprep.subr.mxu0 0.0
        %503 = vmatpush1.msra.mxu0 0.0
        %504 = vmatprep.subr.mxu0 0.0
        %505 = vmatpush1.msra.mxu0 0.0
        %506 = vmatprep.mubr.f32.mxu0 0.0
        %507 = vmatmul.mubr.f32.gmra.mrb[0].mxu0 %v419
        %v508 = vpop.f32.mrb[0].mxu0
        %v509 = vadd.f32 %v415, %v508
        %v510 = vpop.f32.mrb[0].mxu0
        %511 = vmatprep.mubr.f32.mxu0 0.0
        %512 = vmatmul.mubr.f32.gmra.mrb[0].mxu0 %v422
        %v513 = vpop.f32.mrb[0].mxu0
        %v514 = vadd.f32 %v415, %v513
        %v515 = vpop.f32.mrb[0].mxu0
        %516 = vmatprep.mubr.f32.mxu0 0.0
        %517 = vmatmul.mubr.f32.gmra.mrb[0].mxu0 %v425
        %v518 = vpop.f32.mrb[0].mxu0
        %v519 = vadd.f32 %v415, %v518
        %v520 = vpop.f32.mrb[0].mxu0
        %521 = vmatprep.mubr.f32.mxu0 0.0
        %522 = vmatmul.mubr.f32.gmra.mrb[0].mxu0 %v428
        %v523 = vpop.f32.mrb[0].mxu0
        %v524 = vadd.f32 %v415, %v523
        %v525 = vpop.f32.mrb[0].mxu0
        %526 = vmatprep.mubr.f32.mxu0 0.0
        %527 = vmatmul.mubr.f32.gmra.mrb[0].mxu0 %v431
        %v528 = vpop.f32.mrb[0].mxu0
        %v529 = vadd.f32 %v415, %v528
        %v530 = vpop.f32.mrb[0].mxu0
        %531 = vmatprep.mubr.f32.mxu0 0.0
        %532 = vmatmul.mubr.f32.gmra.mrb[0].mxu0 %v434
        %v533 = vpop.f32.mrb[0].mxu0
        %v534 = vadd.f32 %v415, %v533
        %v535 = vpop.f32.mrb[0].mxu0
        %536 = vmatprep.mubr.f32.mxu0 0.0
        %537 = vmatmul.mubr.f32.gmra.mrb[0].mxu0 %v437
        %v538 = vpop.f32.mrb[0].mxu0
        %v539 = vadd.f32 %v415, %v538
        %v540 = vpop.f32.mrb[0].mxu0
        %541 = vmatprep.mubr.f32.mxu0 0.0
        %542 = vmatmul.mubr.f32.gmra.mrb[0].mxu0 %v440
        %v543 = vpop.f32.mrb[0].mxu0
        %v544 = vadd.f32 %v415, %v543
        %v545 = vpop.f32.mrb[0].mxu0
        %546 = vdwg.mxu0
        %v547 = vld [vmem:[%s329] sm:$0xff]
        %v548 = vld [vmem:[%s329 + $0x8] sm:$0xff]
        %v549 = vld [vmem:[%s329 + $0x10] sm:$0xff]
        %v550 = vld [vmem:[%s329 + $0x18] sm:$0xff]
        %v551 = vld [vmem:[%s329 + $0x20] sm:$0xff]
        %v552 = vld [vmem:[%s329 + $0x28] sm:$0xff]
        %v553 = vld [vmem:[%s329 + $0x30] sm:$0xff]
        %v554 = vld [vmem:[%s329 + $0x38] sm:$0xff]
        %v555 = vld [vmem:[%s338] sm:$0xff]
        %v556 = vld [vmem:[%s338 + $0x8] sm:$0xff]
        %v557 = vld [vmem:[%s338 + $0x10] sm:$0xff]
        %v558 = vld [vmem:[%s338 + $0x18] sm:$0xff]
        %v559 = vld [vmem:[%s338 + $0x20] sm:$0xff]
        %v560 = vld [vmem:[%s338 + $0x28] sm:$0xff]
        %v561 = vld [vmem:[%s338 + $0x30] sm:$0xff]
        %v562 = vld [vmem:[%s338 + $0x38] sm:$0xff]
        %v563 = vmul.f32 %v509, %v547
        %v564 = vmul.f32 %v514, %v548
        %v565 = vmul.f32 %v519, %v549
        %v566 = vmul.f32 %v524, %v550
        %v567 = vmul.f32 %v529, %v551
        %v568 = vmul.f32 %v534, %v552
        %v569 = vmul.f32 %v539, %v553
        %v570 = vmul.f32 %v544, %v554
        %vm571 = vcmask 130048
        %v572 = vsel %vm571, %v563, 0.0
        %573 = vadd.xlane.f32.xlu0 %v572
        %v574 = vpop.xlane.xlu0 %573
        %v575 = vsel %vm571, %v564, 0.0
        %576 = vadd.xlane.f32.xlu0 %v575
        %v577 = vpop.xlane.xlu0 %576
        %v578 = vsel %vm571, %v565, 0.0
        %579 = vadd.xlane.f32.xlu0 %v578
        %v580 = vpop.xlane.xlu0 %579
        %v581 = vsel %vm571, %v566, 0.0
        %582 = vadd.xlane.f32.xlu0 %v581
        %v583 = vpop.xlane.xlu0 %582
        %v584 = vsel %vm571, %v567, 0.0
        %585 = vadd.xlane.f32.xlu0 %v584
        %v586 = vpop.xlane.xlu0 %585
        %v587 = vsel %vm571, %v568, 0.0
        %588 = vadd.xlane.f32.xlu0 %v587
        %v589 = vpop.xlane.xlu0 %588
        %v590 = vsel %vm571, %v569, 0.0
        %591 = vadd.xlane.f32.xlu0 %v590
        %v592 = vpop.xlane.xlu0 %591
        %v593 = vsel %vm571, %v570, 0.0
        %594 = vadd.xlane.f32.xlu0 %v593
        %v595 = vpop.xlane.xlu0 %594
        %v596 = vmul.f32 %v574, 0.25
        %v597 = vmul.f32 %v577, 0.25
        %v598 = vmul.f32 %v580, 0.25
        %v599 = vmul.f32 %v583, 0.25
        %v600 = vmul.f32 %v586, 0.25
        %v601 = vmul.f32 %v589, 0.25
        %v602 = vmul.f32 %v592, 0.25
        %v603 = vmul.f32 %v595, 0.25
        %v612 = vlaneseq
        %v613 = vand.u32 %v612, 127
        %v614 = vlaneseq
        %v615 = vshrl.u32 %v614, 7
        %v616 = vsub.s32 %v613, %v615
        %v617 = vrot.slane %v596, %v616
        %v618 = vlaneseq
        %v619 = vshrl.u32 %v618, 7
        %v620 = vsub.s32 %v613, %v619
        %v621 = vrot.slane %v597, %v620
        %v622 = vlaneseq
        %v623 = vshrl.u32 %v622, 7
        %v624 = vsub.s32 %v613, %v623
        %v625 = vrot.slane %v598, %v624
        %v626 = vlaneseq
        %v627 = vshrl.u32 %v626, 7
        %v628 = vsub.s32 %v613, %v627
        %v629 = vrot.slane %v599, %v628
        %v630 = vlaneseq
        %v631 = vshrl.u32 %v630, 7
        %v632 = vsub.s32 %v613, %v631
        %v633 = vrot.slane %v600, %v632
        %v634 = vlaneseq
        %v635 = vshrl.u32 %v634, 7
        %v636 = vsub.s32 %v613, %v635
        %v637 = vrot.slane %v601, %v636
        %v638 = vlaneseq
        %v639 = vshrl.u32 %v638, 7
        %v640 = vsub.s32 %v613, %v639
        %v641 = vrot.slane %v602, %v640
        %v642 = vlaneseq
        %v643 = vshrl.u32 %v642, 7
        %v644 = vsub.s32 %v613, %v643
        %v645 = vrot.slane %v603, %v644
        %vm646 = vcmask 1041409
        %v647 = vsel %vm646, %v621, %v617
        %vm648 = vcmask 1042434
        %v649 = vsel %vm648, %v625, %v647
        %vm650 = vcmask 1043459
        %v651 = vsel %vm650, %v629, %v649
        %vm652 = vcmask 1044484
        %v653 = vsel %vm652, %v633, %v651
        %vm654 = vcmask 1045509
        %v655 = vsel %vm654, %v637, %v653
        %vm656 = vcmask 1046534
        %v657 = vsel %vm656, %v641, %v655
        %vm658 = vcmask 1047559
        %v659 = vsel %vm658, %v645, %v657
        %vm661 = vcmask 64512
        %v662 = vsel %vm661, %v659, -inf
        %663 = vmax.xlane.f32.xlu0 %v662
        %v664 = vpop.xlane.xlu0 %663
        %v666 = vlaneseq
        %v667 = vshrl.u32 %v666, 7
        %v668 = vsub.s32 0, %v667
        %v669 = vrot.slane %v664, %v668
        %v670 = vlaneseq
        %v671 = vshrl.u32 %v670, 7
        %v672 = vsub.s32 1, %v671
        %v673 = vrot.slane %v664, %v672
        %v674 = vlaneseq
        %v675 = vshrl.u32 %v674, 7
        %v676 = vsub.s32 2, %v675
        %v677 = vrot.slane %v664, %v676
        %v678 = vlaneseq
        %v679 = vshrl.u32 %v678, 7
        %v680 = vsub.s32 3, %v679
        %v681 = vrot.slane %v664, %v680
        %v682 = vlaneseq
        %v683 = vshrl.u32 %v682, 7
        %v684 = vsub.s32 4, %v683
        %v685 = vrot.slane %v664, %v684
        %v686 = vlaneseq
        %v687 = vshrl.u32 %v686, 7
        %v688 = vsub.s32 5, %v687
        %v689 = vrot.slane %v664, %v688
        %v690 = vlaneseq
        %v691 = vshrl.u32 %v690, 7
        %v692 = vsub.s32 6, %v691
        %v693 = vrot.slane %v664, %v692
        %v694 = vlaneseq
        %v695 = vshrl.u32 %v694, 7
        %v696 = vsub.s32 7, %v695
        %v697 = vrot.slane %v664, %v696
        %v706 = vsub.f32 %v596, %v669
        %v707 = vsub.f32 %v597, %v673
        %v708 = vsub.f32 %v598, %v677
        %v709 = vsub.f32 %v599, %v681
        %v710 = vsub.f32 %v600, %v685
        %v711 = vsub.f32 %v601, %v689
        %v712 = vsub.f32 %v602, %v693
        %v713 = vsub.f32 %v603, %v697
        %v714 = vmul.f32 %v706, 1.442695
        %v715 = vpow.pop %v714
        %v716 = vmul.f32 %v707, 1.442695
        %v717 = vpow.pop %v716
        %v718 = vmul.f32 %v708, 1.442695
        %v719 = vpow.pop %v718
        %v720 = vmul.f32 %v709, 1.442695
        %v721 = vpow.pop %v720
        %v722 = vmul.f32 %v710, 1.442695
        %v723 = vpow.pop %v722
        %v724 = vmul.f32 %v711, 1.442695
        %v725 = vpow.pop %v724
        %v726 = vmul.f32 %v712, 1.442695
        %v727 = vpow.pop %v726
        %v728 = vmul.f32 %v713, 1.442695
        %v729 = vpow.pop %v728
        %738 = vset.pattern.permute.xlu0 0
        %739 = vperm.xlu0 %738, %v715
        %v740 = vpop.permute.xlu0 %739
        %741 = vset.pattern.permute.xlu0 0
        %742 = vperm.xlu0 %741, %v717
        %v743 = vpop.permute.xlu0 %742
        %744 = vset.pattern.permute.xlu0 0
        %745 = vperm.xlu0 %744, %v719
        %v746 = vpop.permute.xlu0 %745
        %747 = vset.pattern.permute.xlu0 0
        %748 = vperm.xlu0 %747, %v721
        %v749 = vpop.permute.xlu0 %748
        %750 = vset.pattern.permute.xlu0 0
        %751 = vperm.xlu0 %750, %v723
        %v752 = vpop.permute.xlu0 %751
        %753 = vset.pattern.permute.xlu0 0
        %754 = vperm.xlu0 %753, %v725
        %v755 = vpop.permute.xlu0 %754
        %756 = vset.pattern.permute.xlu0 0
        %757 = vperm.xlu0 %756, %v727
        %v758 = vpop.permute.xlu0 %757
        %759 = vset.pattern.permute.xlu0 0
        %760 = vperm.xlu0 %759, %v729
        %v761 = vpop.permute.xlu0 %760
        %v762 = vlaneseq
        %v763 = vshrl.u32 %v762, 7
        %v764 = vsub.s32 %v613, %v763
        %v765 = vrot.slane %v740, %v764
        %v766 = vlaneseq
        %v767 = vshrl.u32 %v766, 7
        %v768 = vsub.s32 %v613, %v767
        %v769 = vrot.slane %v743, %v768
        %v770 = vlaneseq
        %v771 = vshrl.u32 %v770, 7
        %v772 = vsub.s32 %v613, %v771
        %v773 = vrot.slane %v746, %v772
        %v774 = vlaneseq
        %v775 = vshrl.u32 %v774, 7
        %v776 = vsub.s32 %v613, %v775
        %v777 = vrot.slane %v749, %v776
        %v778 = vlaneseq
        %v779 = vshrl.u32 %v778, 7
        %v780 = vsub.s32 %v613, %v779
        %v781 = vrot.slane %v752, %v780
        %v782 = vlaneseq
        %v783 = vshrl.u32 %v782, 7
        %v784 = vsub.s32 %v613, %v783
        %v785 = vrot.slane %v755, %v784
        %v786 = vlaneseq
        %v787 = vshrl.u32 %v786, 7
        %v788 = vsub.s32 %v613, %v787
        %v789 = vrot.slane %v758, %v788
        %v790 = vlaneseq
        %v791 = vshrl.u32 %v790, 7
        %v792 = vsub.s32 %v613, %v791
        %v793 = vrot.slane %v761, %v792
        %v794 = vsel %vm646, %v769, %v765
        %v795 = vsel %vm648, %v773, %v794
        %v796 = vsel %vm650, %v777, %v795
        %v797 = vsel %vm652, %v781, %v796
        %v798 = vsel %vm654, %v785, %v797
        %v799 = vsel %vm656, %v789, %v798
        %v800 = vsel %vm658, %v793, %v799
        %v802 = vsel %vm661, %v800, 0.0
        %803 = vadd.xlane.f32.xlu0 %v802
        %v804 = vpop.xlane.xlu0 %803
        %v805 = vrcp.pop %v804
        %v807 = vlaneseq
        %v808 = vshrl.u32 %v807, 7
        %v809 = vsub.s32 0, %v808
        %v810 = vrot.slane %v805, %v809
        %v811 = vlaneseq
        %v812 = vshrl.u32 %v811, 7
        %v813 = vsub.s32 1, %v812
        %v814 = vrot.slane %v805, %v813
        %v815 = vlaneseq
        %v816 = vshrl.u32 %v815, 7
        %v817 = vsub.s32 2, %v816
        %v818 = vrot.slane %v805, %v817
        %v819 = vlaneseq
        %v820 = vshrl.u32 %v819, 7
        %v821 = vsub.s32 3, %v820
        %v822 = vrot.slane %v805, %v821
        %v823 = vlaneseq
        %v824 = vshrl.u32 %v823, 7
        %v825 = vsub.s32 4, %v824
        %v826 = vrot.slane %v805, %v825
        %v827 = vlaneseq
        %v828 = vshrl.u32 %v827, 7
        %v829 = vsub.s32 5, %v828
        %v830 = vrot.slane %v805, %v829
        %v831 = vlaneseq
        %v832 = vshrl.u32 %v831, 7
        %v833 = vsub.s32 6, %v832
        %v834 = vrot.slane %v805, %v833
        %v835 = vlaneseq
        %v836 = vshrl.u32 %v835, 7
        %v837 = vsub.s32 7, %v836
        %v838 = vrot.slane %v805, %v837
        %v847 = vmul.f32 %v715, %v810
        %v848 = vmul.f32 %v717, %v814
        %v849 = vmul.f32 %v719, %v818
        %v850 = vmul.f32 %v721, %v822
        %v851 = vmul.f32 %v723, %v826
        %v852 = vmul.f32 %v725, %v830
        %v853 = vmul.f32 %v727, %v834
        %v854 = vmul.f32 %v729, %v838
        %856 = vset.pattern.permute.xlu0 0
        %857 = vperm.xlu0 %856, %v847
        %v858 = vpop.permute.xlu0 %857
        %861 = vset.pattern.permute.xlu0 0
        %862 = vperm.xlu0 %861, %v848
        %v863 = vpop.permute.xlu0 %862
        %866 = vset.pattern.permute.xlu0 0
        %867 = vperm.xlu0 %866, %v849
        %v868 = vpop.permute.xlu0 %867
        %871 = vset.pattern.permute.xlu0 0
        %872 = vperm.xlu0 %871, %v850
        %v873 = vpop.permute.xlu0 %872
        %876 = vset.pattern.permute.xlu0 0
        %877 = vperm.xlu0 %876, %v851
        %v878 = vpop.permute.xlu0 %877
        %881 = vset.pattern.permute.xlu0 0
        %882 = vperm.xlu0 %881, %v852
        %v883 = vpop.permute.xlu0 %882
        %886 = vset.pattern.permute.xlu0 0
        %887 = vperm.xlu0 %886, %v853
        %v888 = vpop.permute.xlu0 %887
        %891 = vset.pattern.permute.xlu0 0
        %892 = vperm.xlu0 %891, %v854
        %v893 = vpop.permute.xlu0 %892
        %v895 = vmul.f32 %v858, %v555
        %v896 = vmul.f32 %v863, %v556
        %v897 = vmul.f32 %v868, %v557
        %v898 = vmul.f32 %v873, %v558
        %v899 = vmul.f32 %v878, %v559
        %v900 = vmul.f32 %v883, %v560
        %v901 = vmul.f32 %v888, %v561
        %v902 = vmul.f32 %v893, %v562
        %v903 = vsel %vm571, %v895, 0.0
        %v904 = vrot.slane %v903, 4
        %v905 = vadd.f32 %v903, %v904
        %v906 = vrot.slane %v905, 2
        %v907 = vadd.f32 %v905, %v906
        %v908 = vrot.slane %v907, 1
        %v909 = vadd.f32 %v907, %v908
        %v910 = vsel %vm571, %v896, 0.0
        %v911 = vrot.slane %v910, 4
        %v912 = vadd.f32 %v910, %v911
        %v913 = vrot.slane %v912, 2
        %v914 = vadd.f32 %v912, %v913
        %v915 = vrot.slane %v914, 1
        %v916 = vadd.f32 %v914, %v915
        %v917 = vsel %vm571, %v897, 0.0
        %v918 = vrot.slane %v917, 4
        %v919 = vadd.f32 %v917, %v918
        %v920 = vrot.slane %v919, 2
        %v921 = vadd.f32 %v919, %v920
        %v922 = vrot.slane %v921, 1
        %v923 = vadd.f32 %v921, %v922
        %v924 = vsel %vm571, %v898, 0.0
        %v925 = vrot.slane %v924, 4
        %v926 = vadd.f32 %v924, %v925
        %v927 = vrot.slane %v926, 2
        %v928 = vadd.f32 %v926, %v927
        %v929 = vrot.slane %v928, 1
        %v930 = vadd.f32 %v928, %v929
        %v931 = vsel %vm571, %v899, 0.0
        %v932 = vrot.slane %v931, 4
        %v933 = vadd.f32 %v931, %v932
        %v934 = vrot.slane %v933, 2
        %v935 = vadd.f32 %v933, %v934
        %v936 = vrot.slane %v935, 1
        %v937 = vadd.f32 %v935, %v936
        %v938 = vsel %vm571, %v900, 0.0
        %v939 = vrot.slane %v938, 4
        %v940 = vadd.f32 %v938, %v939
        %v941 = vrot.slane %v940, 2
        %v942 = vadd.f32 %v940, %v941
        %v943 = vrot.slane %v942, 1
        %v944 = vadd.f32 %v942, %v943
        %v945 = vsel %vm571, %v901, 0.0
        %v946 = vrot.slane %v945, 4
        %v947 = vadd.f32 %v945, %v946
        %v948 = vrot.slane %v947, 2
        %v949 = vadd.f32 %v947, %v948
        %v950 = vrot.slane %v949, 1
        %v951 = vadd.f32 %v949, %v950
        %v952 = vsel %vm571, %v902, 0.0
        %v953 = vrot.slane %v952, 4
        %v954 = vadd.f32 %v952, %v953
        %v955 = vrot.slane %v954, 2
        %v956 = vadd.f32 %v954, %v955
        %v957 = vrot.slane %v956, 1
        %v958 = vadd.f32 %v956, %v957
        %v967 = vsel %vm646, %v916, %v909
        %v968 = vsel %vm648, %v923, %v967
        %v969 = vsel %vm650, %v930, %v968
        %v970 = vsel %vm652, %v937, %v969
        %v971 = vsel %vm654, %v944, %v970
        %v972 = vsel %vm656, %v951, %v971
        %v973 = vsel %vm658, %v958, %v972
        %975 = vst.msk [vmem:[%s374] sm:$0xff] %vm571, %v973
        %976 = vst.msk [vmem:[%s393] sm:$0xff] %vm661, %v659
        %v977 = vlaneseq
        %v978 = vshrl.u32 %v977, 7
        %v979 = vsub.s32 %v613, %v978
        %v980 = vrot.slane %v858, %v979
        %v981 = vlaneseq
        %v982 = vshrl.u32 %v981, 7
        %v983 = vsub.s32 %v613, %v982
        %v984 = vrot.slane %v863, %v983
        %v985 = vlaneseq
        %v986 = vshrl.u32 %v985, 7
        %v987 = vsub.s32 %v613, %v986
        %v988 = vrot.slane %v868, %v987
        %v989 = vlaneseq
        %v990 = vshrl.u32 %v989, 7
        %v991 = vsub.s32 %v613, %v990
        %v992 = vrot.slane %v873, %v991
        %v993 = vlaneseq
        %v994 = vshrl.u32 %v993, 7
        %v995 = vsub.s32 %v613, %v994
        %v996 = vrot.slane %v878, %v995
        %v997 = vlaneseq
        %v998 = vshrl.u32 %v997, 7
        %v999 = vsub.s32 %v613, %v998
        %v1000 = vrot.slane %v883, %v999
        %v1001 = vlaneseq
        %v1002 = vshrl.u32 %v1001, 7
        %v1003 = vsub.s32 %v613, %v1002
        %v1004 = vrot.slane %v888, %v1003
        %v1005 = vlaneseq
        %v1006 = vshrl.u32 %v1005, 7
        %v1007 = vsub.s32 %v613, %v1006
        %v1008 = vrot.slane %v893, %v1007
        %v1009 = vsel %vm646, %v984, %v980
        %v1010 = vsel %vm648, %v988, %v1009
        %v1011 = vsel %vm650, %v992, %v1010
        %v1012 = vsel %vm652, %v996, %v1011
        %v1013 = vsel %vm654, %v1000, %v1012
        %v1014 = vsel %vm656, %v1004, %v1013
        %v1015 = vsel %vm658, %v1008, %v1014
        %1017 = vst.msk [vmem:[%s397] sm:$0xff] %vm661, %v1015
        %s1018 = sand.u32 %s156, 1
        %s1019 = scalar_lea.sflag [#allocation4], %s1018
        %s1020 = sand.u32 %s156, 1
        %s1021 = smul.addr %s1020, 8
        %s1022 = scalar_lea.vmem [#allocation8], %s1021
        %p1023 = scmp.lt.s32.totalorder %s28, 1
        %s1024 = scalar_select %p1023, %s28, 1
        %s1025 = smul.addr %s1024, 8
        %s1026 = scalar_lea.vmem %s6, %s1025
        %p1027 = scmp.lt.s32.totalorder %s28, 1
        %s1028 = scalar_select %p1027, %s28, 1
        %s1029 = smul.addr %s1028, 8
        %s1030 = scalar_lea.vmem %s7, %s1029
        // Predicated region
        $region53: #{segment_attention_forward.1} parent=39 // pred_check
          %p1031 = pneg %p166
        $region54: #{segment_attention_forward.1} parent=39 // pred_check_branch
          %1033 = sbr.rel (%p1031) target = $region56
        $region55: #{segment_attention_forward.1} parent=39 // pred_region
          %s1035 = ssub.s32 128, 128
          %1036 = vsyncadd %s1019, %s1035
          %s1037 = smul.addr %s28, 128
          %s1038 = scalar_lea.hbm %s5, %s1037
          %s1040 = sshll.u32 %s1022, 4
          %s1041 = int_to_ptr.vmem [resolvable:$true] %s1040
          %1043 = dma.vmem_to_hbm [thread:$0]  %s1041, 128, %s1038, %s1019
        $region56: #{segment_attention_forward.1} parent=39 // pred_fallthru
          _
        // Predicated region
        $region57: #{segment_attention_forward.1} parent=39 // pred_check
          %p1044 = pneg %p192
        $region58: #{segment_attention_forward.1} parent=39 // pred_check_branch
          %1046 = sbr.rel (%p1044) target = $region60
        $region59: #{segment_attention_forward.1} parent=39 // pred_region
          _
        $region60: #{segment_attention_forward.1} parent=39 // pred_fallthru
          _
        // Predicated region
        $region61: #{segment_attention_forward.1} parent=39 // pred_check
          %p1047 = pneg %p218
        $region62: #{segment_attention_forward.1} parent=39 // pred_check_branch
          %1049 = sbr.rel (%p1047) target = $region64
        $region63: #{segment_attention_forward.1} parent=39 // pred_region
          _
        $region64: #{segment_attention_forward.1} parent=39 // pred_fallthru
          _
      $region40: #{segment_attention_forward.1} parent=5 // pred_fallthru
        _
      %p1050 = scmp.le.s32.totalorder 2, %s23
      // Predicated region
      $region65: #{segment_attention_forward.1} parent=5 // pred_check
        %p1051 = pneg %p1050
      $region66: #{segment_attention_forward.1} parent=5 // pred_check_branch
        %1053 = sbr.rel (%p1051) target = $region68
      $region67: #{segment_attention_forward.1} parent=5 // pred_region
        %s1054 = ssub.s32 %s23, 2
        // Predicated region
        $region69: #{segment_attention_forward.1} parent=67 // pred_check
          %p1055 = pneg %p172
        $region70: #{segment_attention_forward.1} parent=67 // pred_check_branch
          %1057 = sbr.rel (%p1055) target = $region72
        $region71: #{segment_attention_forward.1} parent=67 // pred_region
          %s1058 = sand.u32 %s157, 1
          %s1059 = scalar_lea.sflag [#allocation4], %s1058
          %s1060 = sand.u32 %s157, 1
          %s1061 = smul.addr %s1060, 8
          %s1062 = scalar_lea.vmem [#allocation8], %s1061
          %1063 = dma.done %s1059, 128
        $region72: #{segment_attention_forward.1} parent=67 // pred_fallthru
          _
        // Predicated region
        $region73: #{segment_attention_forward.1} parent=67 // pred_check
          %p1064 = pneg %p198
        $region74: #{segment_attention_forward.1} parent=67 // pred_check_branch
          %1066 = sbr.rel (%p1064) target = $region76
        $region75: #{segment_attention_forward.1} parent=67 // pred_region
          %p1067 = scmp.lt.s32.totalorder %s29, 1
          %s1068 = scalar_select %p1067, %s29, 1
          %s1069 = smul.addr %s1068, 8
          %s1070 = scalar_lea.vmem %s6, %s1069
        $region76: #{segment_attention_forward.1} parent=67 // pred_fallthru
          _
        // Predicated region
        $region77: #{segment_attention_forward.1} parent=67 // pred_check
          %p1071 = pneg %p224
        $region78: #{segment_attention_forward.1} parent=67 // pred_check_branch
          %1073 = sbr.rel (%p1071) target = $region80
        $region79: #{segment_attention_forward.1} parent=67 // pred_region
          %p1074 = scmp.lt.s32.totalorder %s29, 1
          %s1075 = scalar_select %p1074, %s29, 1
          %s1076 = smul.addr %s1075, 8
          %s1077 = scalar_lea.vmem %s7, %s1076
        $region80: #{segment_attention_forward.1} parent=67 // pred_fallthru
          _
      $region68: #{segment_attention_forward.1} parent=5 // pred_fallthru
        _
    $region6: #{segment_attention_forward.1} parent=1 // loop_footer
      %s27 = sadd.s32 1, %s23
    $region7: #{segment_attention_forward.1} parent=1 // loop_footer_branch
      %22 = sbr.rel target = $region3
    $region8: #{segment_attention_forward.1} parent=1 // loop_exit
      _
    %1078 = vsyncpa [#allocation3], 1
    %s1079 = scalar_lea.sflag [#allocation3], 1
    %1080 = vsyncpa %s1079, 1
    %1081 = vsyncpa [#allocation6], 1
    %s1082 = scalar_lea.sflag [#allocation6], 1
    %1083 = vsyncpa %s1082, 1
    %1084 = vsyncpa [#allocation4], 1
    %s1085 = scalar_lea.sflag [#allocation4], 1
    %1086 = vsyncpa %s1085, 1

</llo_original>
